<compile_context>
chip_gen: v7x
topology: tpu7x:2x2x1
jax: 0.10.0
libtpu: 0.0.40
codegen_flags: <defaults>
</compile_context>

<pallas_src>
import functools
import math

import jax
import jax.numpy as jnp
from jax.experimental import pallas as pl
from jax.experimental.pallas import tpu as pltpu


# --------------------------------------------------------------------------
# Kernels
# --------------------------------------------------------------------------
def _smooth_kernel(logits_ref, targets_ref, out_ref, *,
                   n_classes, smoothing, ignore_index, batch):
    """Per-row sum_j t_j * (log t_j - log_softmax(x)_j)  (smoothing > 0 path)."""
    x = logits_ref[...].astype(jnp.float32)            # (TB, C) f32 in VMEM
    tb, c = x.shape

    # log-softmax statistics without materializing log_probs.
    m = jnp.max(x, axis=-1, keepdims=True)
    shifted = x - m
    lse = jnp.log(jnp.sum(jnp.exp(shifted), axis=-1, keepdims=True))   # (TB, 1)

    tgt = targets_ref[...]                               # (TB, 1) int32
    col = jax.lax.broadcasted_iota(jnp.int32, (tb, c), 1)

    has_ignore = 0 <= ignore_index < n_classes
    num_ignore = 1 + int(has_ignore)
    fill = smoothing / (n_classes - num_ignore)
    conf = 1.0 - smoothing
    # Compile-time scalars (no per-element EUP log).  0*log(0) := 0 when smoothing == 1.
    log_fill = math.log(fill)
    conf_log_conf = conf * math.log(conf) if conf > 0.0 else 0.0

    # Single fused weighted lane reduction:
    #   t_j = fill + (conf - fill)*[j == tgt & tgt != ign] - fill*[j == ign]
    #   cross_row = sum_j t_j * logp_j = sum_j t_j * shifted_j - lse * (sum_j t_j)
    if has_ignore:
        # Edge rows (target == ignore_index): the scatter is overridden to 0,
        # so the distribution is `fill` everywhere except the ignored column.
        is_edge = tgt == ignore_index                                   # (TB, 1)
        is_tgt = (col == tgt) & jnp.logical_not(is_edge)                # (TB, C)
        w = jnp.where(is_tgt, conf, fill)
        w = jnp.where(col == ignore_index, 0.0, w)
        sum_t = jnp.where(is_edge, fill * (n_classes - 1), 1.0)         # (TB, 1)
        ent = jnp.where(is_edge,
                        fill * log_fill * (n_classes - 1),
                        conf_log_conf + fill * log_fill * (n_classes - num_ignore))
    else:
        w = jnp.where(col == tgt, conf, fill)
        sum_t = 1.0
        ent = conf_log_conf + fill * log_fill * (n_classes - 1)

    cross = jnp.sum(w * shifted, axis=-1, keepdims=True) - lse * sum_t  # (TB, 1)
    kl_row = ent - cross

    # Mask tail rows of a partial last block (no wrapper-side padding).
    row = jax.lax.broadcasted_iota(jnp.int32, (tb, 1), 0) + pl.program_id(0) * tb
    out_ref[...] = jnp.where(row < batch, kl_row, 0.0)


def _nll_kernel(logits_ref, targets_ref, out_ref, *, ignore_index, batch):
    """Per-row -log_softmax(x)[target], 0 for ignored rows (smoothing == 0 path)."""
    x = logits_ref[...].astype(jnp.float32)
    tb, c = x.shape
    m = jnp.max(x, axis=-1, keepdims=True)
    shifted = x - m
    lse = jnp.log(jnp.sum(jnp.exp(shifted), axis=-1, keepdims=True))
    tgt = targets_ref[...]
    col = jax.lax.broadcasted_iota(jnp.int32, (tb, c), 1)
    logp_tgt = jnp.sum(jnp.where(col == tgt, shifted, 0.0),
                       axis=-1, keepdims=True) - lse
    row = jax.lax.broadcasted_iota(jnp.int32, (tb, 1), 0) + pl.program_id(0) * tb
    valid = (tgt != ignore_index) & (row < batch)
    out_ref[...] = jnp.where(valid, -logp_tgt, 0.0)


# --------------------------------------------------------------------------
# Tiling / VMEM sizing
# --------------------------------------------------------------------------
def _vmem_budgets():
    """(sizing_budget, vmem_limit_bytes) from the actual chip's VMEM capacity."""
    try:
        cap = int(pltpu.get_tpu_info().vmem_capacity_bytes)
    except Exception:
        cap = 64 * 1024 * 1024        # conservative fallback (v7x per-TC VMEM)
    # Scoped VMEM limit we request from the compiler (leave headroom for its scratch).
    vmem_limit = min(cap - 16 * 1024 * 1024, 100 * 1024 * 1024)
    vmem_limit = max(vmem_limit, 32 * 1024 * 1024)
    # More conservative budget used for working-set sizing.
    return (vmem_limit * 3) // 4, vmem_limit


def _pick_row_tile(batch, n_classes, itemsize, vmem_budget):
    """Row-tile: sublane-aligned, ~4 MiB native input, bounded by the VMEM budget."""
    sub = max(8, 32 // max(1, itemsize))          # 8 (f32), 16 (bf16), 32 (int8)
    if batch <= sub:
        return batch                              # single block == full batch dim
    # Working-set model (bytes per logit row resident in VMEM at once):
    #   2 * C * itemsize    double-buffered native-dtype input DMA
    #   ~6 * C * 4          f32 temporaries (upcast, shifted, exp, weights, masks)
    bytes_per_row = 2 * n_classes * itemsize + 6 * n_classes * 4 + 16
    tb_vmem = vmem_budget // bytes_per_row
    tb_dma = (4 * 1024 * 1024) // max(1, n_classes * itemsize)
    tb = min(tb_vmem, tb_dma, 1024)
    tb = max(sub, (tb // sub) * sub)
    # Keep blocks within the array extent (tail block may still be partial).
    tb = min(tb, (batch // sub) * sub)
    # Prefer >=2 grid steps so v7x's two TensorCores can split the 'parallel' axis.
    if tb >= batch:
        half = -(-batch // 2)
        tb = max(sub, min(tb, -(-half // sub) * sub))
    return tb


# --------------------------------------------------------------------------
# Wrapper
# --------------------------------------------------------------------------
def label_smoothing_loss_with_logits(logits, targets, *, n_classes,
                                     smoothing=0.0, ignore_index=-100):
    """logits: (B, C) float (any float dtype), targets: (B,) int. Returns scalar f32."""
    B, C = logits.shape
    assert C == n_classes
    assert 0 <= smoothing <= 1

    itemsize = jnp.dtype(logits.dtype).itemsize
    budget, vmem_limit = _vmem_budgets()
    tb = _pick_row_tile(B, C, itemsize, budget)
    num_tiles = pl.cdiv(B, tb)

    targets_2d = targets.reshape(B, 1).astype(jnp.int32)

    if smoothing > 0:
        kernel = functools.partial(
            _smooth_kernel, n_classes=int(n_classes),
            smoothing=float(smoothing), ignore_index=int(ignore_index), batch=int(B))
    else:
        kernel = functools.partial(
            _nll_kernel, ignore_index=int(ignore_index), batch=int(B))

    cost = pl.CostEstimate(
        flops=10 * B * C,
        transcendentals=B * C,                       # exp per element
        bytes_accessed=B * C * itemsize + B * 4 + B * 4)

    per_row = pl.pallas_call(
        kernel,
        out_shape=jax.ShapeDtypeStruct((B, 1), jnp.float32),
        grid=(num_tiles,),
        in_specs=[
            pl.BlockSpec((tb, C), lambda i: (i, 0)),   # logits, native dtype DMA
            pl.BlockSpec((tb, 1), lambda i: (i, 0)),   # targets
        ],
        out_specs=pl.BlockSpec((tb, 1), lambda i: (i, 0)),
        compiler_params=pltpu.CompilerParams(
            dimension_semantics=("parallel",),
            vmem_limit_bytes=int(vmem_limit)),
        cost_estimate=cost,
    )(logits, targets_2d)

    per_row = per_row[:, 0]
    if smoothing > 0:
        # KLDivLoss(reduction='batchmean'): divide by the batch size.
        return jnp.sum(per_row) / jnp.float32(B)
    # NLLLoss(ignore_index): mean over valid rows.
    # (If ALL rows are ignored this is 0/0 -> NaN, matching PyTorch semantics.)
    count = jnp.sum((targets != ignore_index).astype(jnp.float32))
    return jnp.sum(per_row) / count


# --------------------------------------------------------------------------
# Pure-JAX reference + test harness
# --------------------------------------------------------------------------
def _reference(logits, targets, *, n_classes, smoothing, ignore_index):
    """Pure-JAX reference mirroring the PyTorch module exactly."""
    logp = jax.nn.log_softmax(logits.astype(jnp.float32), axis=-1)
    B, C = logits.shape
    if smoothing > 0:
        num_ignore_ixs = 1 + (0 <= ignore_index < n_classes)
        fill = smoothing / (n_classes - num_ignore_ixs)
        t = jnp.full((B, C), fill, dtype=jnp.float32)
        t = t.at[jnp.arange(B), targets].set(1.0 - smoothing)
        if 0 <= ignore_index < n_classes:
            t = t.at[:, ignore_index].set(0.0)
        term = jnp.where(t > 0, t * (jnp.log(jnp.where(t > 0, t, 1.0)) - logp), 0.0)
        return jnp.sum(term) / B
    valid = targets != ignore_index
    picked = -logp[jnp.arange(B), targets]
    return jnp.sum(jnp.where(valid, picked, 0.0)) / jnp.sum(valid.astype(jnp.float32))


if __name__ == "__main__":
    key = jax.random.PRNGKey(0)
    k1, k2, k3, k4 = jax.random.split(key, 4)

    # Shape set A: multiple-of-8 batch, two row tiles.
    B1, C1 = 16, 32
    logits1 = jax.random.normal(k1, (B1, C1), dtype=jnp.float32)
    targets1 = jax.random.randint(k2, (B1,), 0, C1, dtype=jnp.int32)
    targets1_edge = targets1.at[0].set(3)   # hit the target == ignore_index edge case

    # Shape set B: B not a multiple of the tile, C not a multiple of 128
    # (exercises the in-kernel tail-row mask and lane padding of reductions).
    B2, C2 = 13, 100
    logits2 = jax.random.normal(k3, (B2, C2), dtype=jnp.bfloat16)
    targets2 = jax.random.randint(k4, (B2,), 0, C2, dtype=jnp.int32)
    targets2_edge = targets2.at[1].set(7)

    cases = [
        dict(logits=logits1, tgt=targets1,      n=C1, smoothing=0.1, ignore_index=-100),
        dict(logits=logits1, tgt=targets1,      n=C1, smoothing=0.0, ignore_index=-100),
        dict(logits=logits1, tgt=targets1_edge, n=C1, smoothing=0.1, ignore_index=3),
        dict(logits=logits1, tgt=targets1_edge, n=C1, smoothing=0.0, ignore_index=3),
        dict(logits=logits2, tgt=targets2,      n=C2, smoothing=0.2, ignore_index=-100),
        dict(logits=logits2, tgt=targets2_edge, n=C2, smoothing=0.2, ignore_index=7),
        dict(logits=logits2, tgt=targets2_edge, n=C2, smoothing=0.0, ignore_index=7),
    ]

    results = []
    for cfg in cases:
        got = label_smoothing_loss_with_logits(
            cfg["logits"], cfg["tgt"], n_classes=cfg["n"],
            smoothing=cfg["smoothing"], ignore_index=cfg["ignore_index"])
        results.append(got)
    jax.block_until_ready(results)

    for cfg, got in zip(cases, results):
        want = _reference(cfg["logits"], cfg["tgt"], n_classes=cfg["n"],
                          smoothing=cfg["smoothing"], ignore_index=cfg["ignore_index"])
        tol = 3e-3 if cfg["logits"].dtype == jnp.bfloat16 else 1e-5
        assert jnp.allclose(got, want, atol=tol, rtol=tol), (cfg["smoothing"],
                                                             cfg["ignore_index"],
                                                             got, want)

    print("KERNEL_OK")
</pallas_src>

<mosaic_0001>
module attributes {stable_mosaic.version = 11 : i64} {
  func.func @_smooth_kernel(%arg0: i32, %arg1: memref<8x32xf32, #tpu.memory_space<vmem>>, %arg2: memref<8x1xi32, #tpu.memory_space<vmem>>, %arg3: memref<8x1xf32, #tpu.memory_space<vmem>>) attributes {dimension_semantics = [#tpu.dimension_semantics<parallel>], iteration_bounds = array<i64: 2>, scalar_prefetch = 0 : i64, scratch_operands = 0 : i64, tpu.core_type = #tpu.core_type<tc>, window_params = [{transform_indices = @transform_0, window_bounds = array<i64: 8, 32>}, {transform_indices = @transform_1, window_bounds = array<i64: 8, 1>}, {transform_indices = @transform_2, window_bounds = array<i64: 8, 1>}]} {
    %c0 = arith.constant 0 : index
    %c0_0 = arith.constant 0 : index
    %0 = vector.load %arg1[%c0, %c0_0] : memref<8x32xf32, #tpu.memory_space<vmem>>, vector<8x32xf32>
    %cst = arith.constant dense<0xFF800000> : vector<8xf32>
    %1 = vector.multi_reduction <maximumf>, %0, %cst [1] : vector<8x32xf32> to vector<8xf32>
    %2 = vector.shape_cast %1 : vector<8xf32> to vector<8x1xf32>
    %3 = vector.broadcast %2 : vector<8x1xf32> to vector<8x32xf32>
    %4 = arith.subf %0, %3 : vector<8x32xf32>
    %5 = math.exp %4 : vector<8x32xf32>
    %cst_1 = arith.constant dense<0.000000e+00> : vector<8xf32>
    %6 = vector.multi_reduction <add>, %5, %cst_1 [1] : vector<8x32xf32> to vector<8xf32>
    %7 = vector.shape_cast %6 : vector<8xf32> to vector<8x1xf32>
    %8 = math.log %7 : vector<8x1xf32>
    %c0_2 = arith.constant 0 : index
    %c0_3 = arith.constant 0 : index
    %9 = vector.load %arg2[%c0_2, %c0_3] : memref<8x1xi32, #tpu.memory_space<vmem>>, vector<8x1xi32>
    %10 = tpu.iota {dimensions = array<i32: 1>} : vector<8x32xi32>
    %11 = vector.broadcast %9 : vector<8x1xi32> to vector<8x32xi32>
    %12 = arith.cmpi eq, %10, %11 : vector<8x32xi32>
    %cst_4 = arith.constant 0.899999976 : f32
    %cst_5 = arith.constant 0.0032258064 : f32
    %13 = vector.broadcast %cst_4 : f32 to vector<8x32xf32>
    %14 = vector.broadcast %cst_5 : f32 to vector<8x32xf32>
    %15 = arith.select %12, %13, %14 : vector<8x32xi1>, vector<8x32xf32>
    %16 = arith.mulf %15, %4 : vector<8x32xf32>
    %cst_6 = arith.constant dense<0.000000e+00> : vector<8xf32>
    %17 = vector.multi_reduction <add>, %16, %cst_6 [1] : vector<8x32xf32> to vector<8xf32>
    %18 = vector.shape_cast %17 : vector<8xf32> to vector<8x1xf32>
    %cst_7 = arith.constant 1.000000e+00 : f32
    %19 = vector.broadcast %cst_7 : f32 to vector<8x1xf32>
    %20 = arith.mulf %8, %19 : vector<8x1xf32>
    %21 = arith.subf %18, %20 : vector<8x1xf32>
    %cst_8 = arith.constant -0.668481708 : f32
    %22 = vector.broadcast %cst_8 : f32 to vector<8x1xf32>
    %23 = arith.subf %22, %21 : vector<8x1xf32>
    %24 = tpu.iota {dimensions = array<i32: 0>} : vector<8x1xi32>
    %c8_i32 = arith.constant 8 : i32
    %25 = arith.muli %arg0, %c8_i32 : i32
    %26 = vector.broadcast %25 : i32 to vector<8x1xi32>
    %27 = arith.addi %24, %26 : vector<8x1xi32>
    %c16_i32 = arith.constant 16 : i32
    %28 = vector.broadcast %c16_i32 : i32 to vector<8x1xi32>
    %29 = arith.cmpi slt, %27, %28 : vector<8x1xi32>
    %cst_9 = arith.constant 0.000000e+00 : f32
    %30 = vector.broadcast %cst_9 : f32 to vector<8x1xf32>
    %31 = arith.select %29, %23, %30 : vector<8x1xi1>, vector<8x1xf32>
    %c0_10 = arith.constant 0 : index
    %c0_11 = arith.constant 0 : index
    %32 = vector.load %arg3[%c0_10, %c0_11] : memref<8x1xf32, #tpu.memory_space<vmem>>, vector<8x1xf32>
    tpu.vector_store %arg3[%c0_10, %c0_11], %31 {strides = array<i32>} : memref<8x1xf32, #tpu.memory_space<vmem>>, vector<8x1xf32>,
    return
  }
  func.func @transform_0(%arg0: i32) -> (i32, i32) {
    %c0_i32 = arith.constant 0 : i32
    %c0_i32_0 = arith.constant 0 : i32
    return %arg0, %c0_i32 : i32, i32
  }
  func.func @transform_1(%arg0: i32) -> (i32, i32) {
    %c0_i32 = arith.constant 0 : i32
    %c0_i32_0 = arith.constant 0 : i32
    return %arg0, %c0_i32 : i32, i32
  }
  func.func @transform_2(%arg0: i32) -> (i32, i32) {
    %c0_i32 = arith.constant 0 : i32
    %c0_i32_0 = arith.constant 0 : i32
    return %arg0, %c0_i32 : i32, i32
  }
}

</mosaic_0001>

<llo_original>
// kernel: tpu_custom_call.1
$region0: #{tpu_custom_call.1}
  #allocation0 [shape = 'u32[]', space=smem, size = 0x4, offset = 0x4, fixed_abs, tag = 'smem constant byte address 0x4 - core index']
  #allocation1 [shape = 'u32[144,128]{1,0:T(1,128)}', space=vmem, size = 0x12000, scoped, tag = 'internal scratch']
  %s0 = inlined_call_operand.vmem [shape: f32[16,32], index: 0, kind: input, shape index: {}]
  %s1 = inlined_call_operand.vmem [shape: s32[16,1], index: 1, kind: input, shape index: {}]
  %s2 = inlined_call_operand.vmem [shape: f32[16,1], index: 2, kind: output, shape index: {}]
  %s3 = sld [smem:[#allocation0]]
  $region41: #{tpu_custom_call.1} parent=0
    _
  %s5 = ssub.s32 1, %s3
  %s6 = scalar_select 0, %s5, %s3
  loop: start=0, step=1, limit=4
  $region2: #{tpu_custom_call.1} parent=0 // loop_pre_header
    _
  $region3: #{tpu_custom_call.1} parent=0 // loop_header
    %s8 = sphi 0, %s12
    %p9 = scmp.ge.s32.totalorder %s8, 4
    %s18 = sphi 0, %s20
    %s21 = sphi 0, %s18
    %s22 = sphi 0, %s21
    %s38 = sphi 0, %s22
    %s44 = sphi 0, %s46
    %s47 = sphi 0, %s44
    %s48 = sphi 0, %s47
    %s64 = sphi 0, %s48
    %s70 = sphi 0, %s72
    %s73 = sphi 0, %s70
    %s74 = sphi 0, %s73
    %s90 = sphi 0, %s74
  $region4: #{tpu_custom_call.1} parent=0 // loop_header_branch
    %11 = sbr.rel (%p9) target = $region8
  $region5: #{tpu_custom_call.1} parent=0 // loop_body
    %s13 = ssub.s32 %s8, 1
    %s14 = ssub.s32 %s8, 2
    %s15 = sadd.s32 %s8, 1
    %s16 = ssub.s32 %s8, %s15
    %p17 = scmp.eq.s32.totalorder %s16, 0
    %s19 = sadd.s32 %s18, 1
    %s20 = scalar_select %p17, %s18, %s19
    %p23 = pneg %p17
    %p24 = scmp.eq.s32.totalorder %s8, 1
    %p25 = por %p23, %p24
    %p26 = scmp.ne.s32.totalorder %s18, %s21
    %p27 = scmp.eq.s32.totalorder %s8, 0
    %p28 = por %p26, %p27
    %p29 = scmp.ne.s32.totalorder %s18, %s21
    %p30 = scmp.eq.s32.totalorder %s13, 1
    %p31 = por %p29, %p30
    %p32 = scmp.ne.s32.totalorder %s21, %s22
    %p33 = scmp.eq.s32.totalorder %s13, 0
    %p34 = por %p32, %p33
    %p35 = scmp.ne.s32.totalorder %s21, %s22
    %p36 = scmp.eq.s32.totalorder %s14, 1
    %p37 = por %p35, %p36
    %p39 = scmp.ne.s32.totalorder %s22, %s38
    %p40 = scmp.eq.s32.totalorder %s14, 0
    %p41 = por %p39, %p40
    %s42 = ssub.s32 %s8, %s15
    %p43 = scmp.eq.s32.totalorder %s42, 0
    %s45 = sadd.s32 %s44, 1
    %s46 = scalar_select %p43, %s44, %s45
    %p49 = pneg %p43
    %p50 = scmp.eq.s32.totalorder %s8, 1
    %p51 = por %p49, %p50
    %p52 = scmp.ne.s32.totalorder %s44, %s47
    %p53 = scmp.eq.s32.totalorder %s8, 0
    %p54 = por %p52, %p53
    %p55 = scmp.ne.s32.totalorder %s44, %s47
    %p56 = scmp.eq.s32.totalorder %s13, 1
    %p57 = por %p55, %p56
    %p58 = scmp.ne.s32.totalorder %s47, %s48
    %p59 = scmp.eq.s32.totalorder %s13, 0
    %p60 = por %p58, %p59
    %p61 = scmp.ne.s32.totalorder %s47, %s48
    %p62 = scmp.eq.s32.totalorder %s14, 1
    %p63 = por %p61, %p62
    %p65 = scmp.ne.s32.totalorder %s48, %s64
    %p66 = scmp.eq.s32.totalorder %s14, 0
    %p67 = por %p65, %p66
    %s68 = ssub.s32 %s8, %s15
    %p69 = scmp.eq.s32.totalorder %s68, 0
    %s71 = sadd.s32 %s70, 1
    %s72 = scalar_select %p69, %s70, %s71
    %p75 = pneg %p69
    %p76 = scmp.eq.s32.totalorder %s8, 1
    %p77 = por %p75, %p76
    %p78 = scmp.ne.s32.totalorder %s70, %s73
    %p79 = scmp.eq.s32.totalorder %s8, 0
    %p80 = por %p78, %p79
    %p81 = scmp.ne.s32.totalorder %s70, %s73
    %p82 = scmp.eq.s32.totalorder %s13, 1
    %p83 = por %p81, %p82
    %p84 = scmp.ne.s32.totalorder %s73, %s74
    %p85 = scmp.eq.s32.totalorder %s13, 0
    %p86 = por %p84, %p85
    %p87 = scmp.ne.s32.totalorder %s73, %s74
    %p88 = scmp.eq.s32.totalorder %s14, 1
    %p89 = por %p87, %p88
    %p91 = scmp.ne.s32.totalorder %s74, %s90
    %p92 = scmp.eq.s32.totalorder %s14, 0
    %p93 = por %p91, %p92
    %p94 = scmp.le.s32.totalorder 1, %s8
    %p95 = scmp.lt.s32.totalorder %s8, 3
    %p96 = pnand %p94, %p95
    %p97 = pneg %p96
    // Predicated region
    $region9: #{tpu_custom_call.1} parent=5 // pred_check
      _
    $region10: #{tpu_custom_call.1} parent=5 // pred_check_branch
      %99 = sbr.rel (%p96) target = $region12
    $region11: #{tpu_custom_call.1} parent=5 // pred_region
      %s100 = ssub.s32 %s8, 1
    $region12: #{tpu_custom_call.1} parent=5 // pred_fallthru
      _
    %p101 = scmp.lt.s32.totalorder %s8, 2
    // Predicated region
    $region13: #{tpu_custom_call.1} parent=5 // pred_check
      %p102 = pneg %p101
    $region14: #{tpu_custom_call.1} parent=5 // pred_check_branch
      %104 = sbr.rel (%p102) target = $region16
    $region15: #{tpu_custom_call.1} parent=5 // pred_region
      // Predicated region
      $region17: #{tpu_custom_call.1} parent=15 // pred_check
        %p105 = pneg %p28
      $region18: #{tpu_custom_call.1} parent=15 // pred_check_branch
        %107 = sbr.rel (%p105) target = $region20
      $region19: #{tpu_custom_call.1} parent=15 // pred_region
        %p108 = scmp.lt.s32.totalorder %s8, 1
        %s109 = scalar_select %p108, %s8, 1
        %s110 = smul.addr %s109, 8
        %s111 = scalar_lea.vmem %s0, %s110
      $region20: #{tpu_custom_call.1} parent=15 // pred_fallthru
        _
      // Predicated region
      $region21: #{tpu_custom_call.1} parent=15 // pred_check
        %p112 = pneg %p54
      $region22: #{tpu_custom_call.1} parent=15 // pred_check_branch
        %114 = sbr.rel (%p112) target = $region24
      $region23: #{tpu_custom_call.1} parent=15 // pred_region
        %p115 = scmp.lt.s32.totalorder %s8, 1
        %s116 = scalar_select %p115, %s8, 1
        %s117 = smul.addr %s116, 8
        %s118 = scalar_lea.vmem %s1, %s117
      $region24: #{tpu_custom_call.1} parent=15 // pred_fallthru
        _
    $region16: #{tpu_custom_call.1} parent=5 // pred_fallthru
      _
    %p119 = scmp.le.s32.totalorder 1, %s8
    %p120 = scmp.lt.s32.totalorder %s8, 3
    %p121 = pnand %p119, %p120
    %p122 = pneg %p121
    // Predicated region
    $region25: #{tpu_custom_call.1} parent=5 // pred_check
      _
    $region26: #{tpu_custom_call.1} parent=5 // pred_check_branch
      %124 = sbr.rel (%p121) target = $region28
    $region27: #{tpu_custom_call.1} parent=5 // pred_region
      %s125 = ssub.s32 %s8, 1
      %p126 = scmp.lt.s32.totalorder %s13, 1
      %s127 = scalar_select %p126, %s13, 1
      %s128 = smul.addr %s127, 8
      %s129 = scalar_lea.vmem %s0, %s128
      %p130 = pneg %p34
      %p131 = pneg %p31
      %p132 = scmp.lt.s32.totalorder %s13, 1
      %s133 = scalar_select %p132, %s13, 1
      %s134 = smul.addr %s133, 8
      %s135 = scalar_lea.vmem %s1, %s134
      %p136 = pneg %p60
      %p137 = pneg %p57
      %p138 = pneg %p86
      %p139 = pneg %p83
      %p140 = scmp.lt.s32.totalorder %s13, 1
      %s141 = scalar_select %p140, %s13, 1
      %s142 = smul.addr %s141, 8
      %s143 = scalar_lea.vmem %s2, %s142
      %p144 = scmp.lt.s32.totalorder %s13, 1
      %s145 = scalar_select %p144, %s13, 1
      %s146 = smul.addr %s145, 8
      %s147 = scalar_lea.vmem %s0, %s146
      %p148 = scmp.lt.s32.totalorder %s13, 1
      %s149 = scalar_select %p148, %s13, 1
      %s150 = smul.addr %s149, 8
      %s151 = scalar_lea.vmem %s1, %s150
      %p152 = scmp.lt.s32.totalorder %s13, 1
      %s153 = scalar_select %p152, %s13, 1
      %s154 = smul.addr %s153, 8
      %s155 = scalar_lea.vmem %s2, %s154
      %v156 = vld [vmem:[%s147] sm:$0xff]
      %vm157 = vcmask 261120
      %v158 = vsel %vm157, %v156, -inf
      %159 = vmax.xlane.f32.xlu0 %v158
      %v160 = vpop.xlane.xlu0 %159
      %v161 = vsub.f32 %v156, %v160
      %v162 = vmul.f32 %v161, 1.442695
      %v163 = vpow.pop %v162
      %v164 = vsel %vm157, %v163, 0.0
      %165 = vadd.xlane.f32.xlu0 %v164
      %v166 = vpop.xlane.xlu0 %165
      %v167 = vlog2.pop %v166
      %v168 = vmul.f32 %v167, 0.6931472
      %v169 = vld [vmem:[%s151] sm:$0xff]
      %v170 = vlaneseq
      %v171 = vand.u32 %v170, 127
      %172 = vset.pattern.permute.xlu0 0
      %173 = vperm.xlu0 %172, %v169
      %v174 = vpop.permute.xlu0 %173
      %vm175 = vcmp.eq.s32.totalorder %v171, %v174
      %v176 = vsel %vm175, 0.9, 0.0032258064
      %v177 = vmul.f32 %v176, %v161
      %v178 = vsel %vm157, %v177, 0.0
      %179 = vadd.xlane.f32.xlu0 %v178
      %v180 = vpop.xlane.xlu0 %179
      %v181 = vsub.f32 %v180, %v168
      %v182 = vsub.f32 -0.6684817, %v181
      %v183 = vlaneseq
      %v184 = vshrl.u32 %v183, 7
      %s185 = smul.u32 %s13, 8
      %v186 = vstv %s185
      %v187 = vadd.s32 %v184, %v186
      %vm188 = vcmp.lt.s32.totalorder %v187, 16
      %v189 = vsel %vm188, %v182, 0.0
      %vm190 = vcmask 7168
      %191 = vst.msk [vmem:[%s155] sm:$0xff] %vm190, %v189
      %p192 = scmp.lt.s32.totalorder %s13, 1
      %s193 = scalar_select %p192, %s13, 1
      %s194 = smul.addr %s193, 8
      %s195 = scalar_lea.vmem %s2, %s194
      // Predicated region
      $region29: #{tpu_custom_call.1} parent=27 // pred_check
        %p196 = pneg %p83
      $region30: #{tpu_custom_call.1} parent=27 // pred_check_branch
        %198 = sbr.rel (%p196) target = $region32
      $region31: #{tpu_custom_call.1} parent=27 // pred_region
        _
      $region32: #{tpu_custom_call.1} parent=27 // pred_fallthru
        _
    $region28: #{tpu_custom_call.1} parent=5 // pred_fallthru
      _
    %p199 = scmp.le.s32.totalorder 2, %s8
    // Predicated region
    $region33: #{tpu_custom_call.1} parent=5 // pred_check
      %p200 = pneg %p199
    $region34: #{tpu_custom_call.1} parent=5 // pred_check_branch
      %202 = sbr.rel (%p200) target = $region36
    $region35: #{tpu_custom_call.1} parent=5 // pred_region
      %s203 = ssub.s32 %s8, 2
      // Predicated region
      $region37: #{tpu_custom_call.1} parent=35 // pred_check
        %p204 = pneg %p89
      $region38: #{tpu_custom_call.1} parent=35 // pred_check_branch
        %206 = sbr.rel (%p204) target = $region40
      $region39: #{tpu_custom_call.1} parent=35 // pred_region
        %p207 = scmp.lt.s32.totalorder %s14, 1
        %s208 = scalar_select %p207, %s14, 1
        %s209 = smul.addr %s208, 8
        %s210 = scalar_lea.vmem %s2, %s209
      $region40: #{tpu_custom_call.1} parent=35 // pred_fallthru
        _
    $region36: #{tpu_custom_call.1} parent=5 // pred_fallthru
      _
  $region6: #{tpu_custom_call.1} parent=0 // loop_footer
    %s12 = sadd.s32 1, %s8
  $region7: #{tpu_custom_call.1} parent=0 // loop_footer_branch
    %7 = sbr.rel target = $region3
  $region8: #{tpu_custom_call.1} parent=0 // loop_exit
    _

</llo_original>
